<compile_context>
chip_gen: v7x
topology: tpu7x:2x2x1
jax: 0.10.0
libtpu: 0.0.40
codegen_flags: <defaults>
</compile_context>

<pallas_src>
import jax
import jax.numpy as jnp
from jax.experimental import pallas as pl
from jax.experimental.pallas import tpu as pltpu

N_NODES = 64
NUM_FEAT = 5
EMBED = 32
LIN_HID = 32
N_CLASSES = 2
N_EDGES = 256

# ---- packed parameter slab layout (all offsets 8-row aligned) ----
SLAB_LANES = 128
R_W1S = 0            # [NUM_FEAT, EMBED]
R_W1N = 8            # [NUM_FEAT, EMBED]
R_W2S = 16           # [EMBED, EMBED]
R_W2N = 48           # [EMBED, EMBED]
R_WL1 = 80           # [EMBED, LIN_HID]
R_WL2 = 112          # [LIN_HID, 128]  (cols >= N_CLASSES are zero)
R_B1 = 144           # [1, EMBED]
R_B2 = 152           # [1, EMBED]
R_BL1 = 160          # [1, LIN_HID]
R_BL2 = 168          # [1, 128]        (cols >= N_CLASSES are zero)
SLAB_ROWS = 176


def gcn_forward_kernel(x_ref, adj_ref, w_ref, out_ref):
    f32 = jnp.float32
    x = x_ref[...]                        # [N, F]
    adj = adj_ref[...]                    # [N, N] row-normalized mean adjacency

    # static slices of the packed slab are free (no DMA, just views/loads)
    w1s = w_ref[R_W1S:R_W1S + NUM_FEAT, :EMBED]
    w1n = w_ref[R_W1N:R_W1N + NUM_FEAT, :EMBED]
    w2s = w_ref[R_W2S:R_W2S + EMBED, :EMBED]
    w2n = w_ref[R_W2N:R_W2N + EMBED, :EMBED]
    wl1 = w_ref[R_WL1:R_WL1 + EMBED, :LIN_HID]
    wl2 = w_ref[R_WL2:R_WL2 + LIN_HID, :]          # [LIN_HID, 128], zero-padded
    b1 = w_ref[R_B1:R_B1 + 1, :EMBED]
    b2 = w_ref[R_B2:R_B2 + 1, :EMBED]
    bl1 = w_ref[R_BL1:R_BL1 + 1, :LIN_HID]
    bl2 = w_ref[R_BL2:R_BL2 + 1, :]                # [1, 128], zero-padded

    # --- SAGEConvCat layer 1: Linear(cat([x, mean_aggr(x)])) == x@Ws + (A@x)@Wn + b ---
    agg = jnp.dot(adj, x, preferred_element_type=f32)
    h = (jnp.dot(x, w1s, preferred_element_type=f32)
         + jnp.dot(agg, w1n, preferred_element_type=f32)
         + b1)
    h = jnp.maximum(h, 0.0)               # torch.relu

    # --- SAGEConvCat layer 2 ---
    agg = jnp.dot(adj, h, preferred_element_type=f32)
    h = (jnp.dot(h, w2s, preferred_element_type=f32)
         + jnp.dot(agg, w2n, preferred_element_type=f32)
         + b2)
    h = jnp.maximum(h, 0.0)

    # --- lin1 + relu; F.dropout(p=0.5, training=False) is identity in eval ---
    s = jnp.dot(h, wl1, preferred_element_type=f32) + bl1
    s = jnp.maximum(s, 0.0)

    # --- lin2 -> lane-dense [N, 128] tile (cols >= N_CLASSES stay zero) ---
    out_ref[...] = jnp.dot(s, wl2, preferred_element_type=f32) + bl2


@jax.jit
def gcn_forward(x, adj, wslab):
    n = x.shape[0]
    flops = 2 * (n * n * NUM_FEAT            # adj @ x
                 + 2 * n * NUM_FEAT * EMBED  # conv1 projections
                 + n * n * EMBED             # adj @ h
                 + 2 * n * EMBED * EMBED     # conv2 projections
                 + n * EMBED * LIN_HID       # lin1
                 + n * LIN_HID * SLAB_LANES)  # lin2 (padded)
    bytes_accessed = 4 * (n * NUM_FEAT + n * n
                          + SLAB_ROWS * SLAB_LANES + n * SLAB_LANES)
    padded = pl.pallas_call(
        gcn_forward_kernel,
        in_specs=[pl.BlockSpec(memory_space=pltpu.MemorySpace.VMEM)] * 3,
        out_specs=pl.BlockSpec(memory_space=pltpu.MemorySpace.VMEM),
        out_shape=jax.ShapeDtypeStruct((n, SLAB_LANES), jnp.float32),
        cost_estimate=pl.CostEstimate(flops=flops, transcendentals=0,
                                      bytes_accessed=bytes_accessed),
    )(x, adj, wslab)
    return padded[:, :N_CLASSES]


def pack_params(params):
    """Pack the 10 parameter tensors into one lane-dense [176, 128] f32 slab."""
    (w1s, w1n, b1, w2s, w2n, b2, wl1, bl1, wl2, bl2) = params
    slab = jnp.zeros((SLAB_ROWS, SLAB_LANES), jnp.float32)
    slab = slab.at[R_W1S:R_W1S + NUM_FEAT, :EMBED].set(w1s)
    slab = slab.at[R_W1N:R_W1N + NUM_FEAT, :EMBED].set(w1n)
    slab = slab.at[R_W2S:R_W2S + EMBED, :EMBED].set(w2s)
    slab = slab.at[R_W2N:R_W2N + EMBED, :EMBED].set(w2n)
    slab = slab.at[R_WL1:R_WL1 + EMBED, :LIN_HID].set(wl1)
    slab = slab.at[R_WL2:R_WL2 + LIN_HID, :N_CLASSES].set(wl2)
    slab = slab.at[R_B1:R_B1 + 1, :EMBED].set(b1)
    slab = slab.at[R_B2:R_B2 + 1, :EMBED].set(b2)
    slab = slab.at[R_BL1:R_BL1 + 1, :LIN_HID].set(bl1)
    slab = slab.at[R_BL2:R_BL2 + 1, :N_CLASSES].set(bl2)
    return slab


def ref_forward(x, adj, params):
    """Pure-JAX reference of the same forward (for correctness check)."""
    (w1s, w1n, b1, w2s, w2n, b2, wl1, bl1, wl2, bl2) = params
    agg = adj @ x
    h = jnp.maximum(x @ w1s + agg @ w1n + b1, 0.0)
    agg = adj @ h
    h = jnp.maximum(h @ w2s + agg @ w2n + b2, 0.0)
    s = jnp.maximum(h @ wl1 + bl1, 0.0)
    return s @ wl2 + bl2


def build_mean_adj(edge_index, n):
    """Dense neighbors-only mean-aggregation matrix (PyG SAGEConv semantics):
    A[i, j] = (#edges j->i) / in_degree(i), duplicate edges counted, no self-loops."""
    src, dst = edge_index[0], edge_index[1]
    a = jnp.zeros((n, n), jnp.float32).at[dst, src].add(1.0)
    deg = jnp.maximum(a.sum(axis=1, keepdims=True), 1.0)
    return a / deg


def init_params(key):
    ks = jax.random.split(key, 10)
    scale = 0.1
    w1s = scale * jax.random.normal(ks[0], (NUM_FEAT, EMBED), jnp.float32)
    w1n = scale * jax.random.normal(ks[1], (NUM_FEAT, EMBED), jnp.float32)
    b1 = scale * jax.random.normal(ks[2], (1, EMBED), jnp.float32)
    w2s = scale * jax.random.normal(ks[3], (EMBED, EMBED), jnp.float32)
    w2n = scale * jax.random.normal(ks[4], (EMBED, EMBED), jnp.float32)
    b2 = scale * jax.random.normal(ks[5], (1, EMBED), jnp.float32)
    wl1 = scale * jax.random.normal(ks[6], (EMBED, LIN_HID), jnp.float32)
    bl1 = scale * jax.random.normal(ks[7], (1, LIN_HID), jnp.float32)
    wl2 = scale * jax.random.normal(ks[8], (LIN_HID, N_CLASSES), jnp.float32)
    bl2 = scale * jax.random.normal(ks[9], (1, N_CLASSES), jnp.float32)
    return (w1s, w1n, b1, w2s, w2n, b2, wl1, bl1, wl2, bl2)


if __name__ == "__main__":
    key = jax.random.PRNGKey(0)
    k_x, k_e, k_p = jax.random.split(key, 3)

    # Node features (mirrors x = torch.tensor(hms).float().reshape(-1, 5))
    x = jax.random.normal(k_x, (N_NODES, NUM_FEAT), jnp.float32)

    # Random edge_index (2, E), densified + mean-normalized for the kernel.
    edge_index = jax.random.randint(k_e, (2, N_EDGES), 0, N_NODES, jnp.int32)
    adj = build_mean_adj(edge_index, N_NODES)

    params = init_params(k_p)
    wslab = pack_params(params)          # packed once, reused every forward

    scores = gcn_forward(x, adj, wslab)
    scores = jax.block_until_ready(scores)

    expected = ref_forward(x, adj, params)
    assert scores.shape == (N_NODES, N_CLASSES)
    assert jnp.allclose(scores, expected, atol=1e-4, rtol=1e-4), "mismatch vs reference"

    print("KERNEL_OK")
</pallas_src>

<mosaic_0001>
module attributes {stable_mosaic.version = 11 : i64} {
  func.func @gcn_forward_kernel(%arg0: memref<64x5xf32, #tpu.memory_space<vmem>>, %arg1: memref<64x64xf32, #tpu.memory_space<vmem>>, %arg2: memref<176x128xf32, #tpu.memory_space<vmem>>, %arg3: memref<64x128xf32, #tpu.memory_space<vmem>>) attributes {dimension_semantics = [], scalar_prefetch = 0 : i64, scratch_operands = 0 : i64, tpu.core_type = #tpu.core_type<tc>} {
    %c0 = arith.constant 0 : index
    %c0_0 = arith.constant 0 : index
    %0 = vector.load %arg0[%c0, %c0_0] : memref<64x5xf32, #tpu.memory_space<vmem>>, vector<64x5xf32>
    %c0_1 = arith.constant 0 : index
    %c0_2 = arith.constant 0 : index
    %1 = vector.load %arg1[%c0_1, %c0_2] : memref<64x64xf32, #tpu.memory_space<vmem>>, vector<64x64xf32>
    %c0_3 = arith.constant 0 : index
    %c0_4 = arith.constant 0 : index
    %2 = vector.load %arg2[%c0_3, %c0_4] : memref<176x128xf32, #tpu.memory_space<vmem>>, vector<5x32xf32>
    %c8 = arith.constant 8 : index
    %c0_5 = arith.constant 0 : index
    %3 = vector.load %arg2[%c8, %c0_5] : memref<176x128xf32, #tpu.memory_space<vmem>>, vector<5x32xf32>
    %c16 = arith.constant 16 : index
    %c0_6 = arith.constant 0 : index
    %4 = vector.load %arg2[%c16, %c0_6] : memref<176x128xf32, #tpu.memory_space<vmem>>, vector<32x32xf32>
    %c48 = arith.constant 48 : index
    %c0_7 = arith.constant 0 : index
    %5 = vector.load %arg2[%c48, %c0_7] : memref<176x128xf32, #tpu.memory_space<vmem>>, vector<32x32xf32>
    %c80 = arith.constant 80 : index
    %c0_8 = arith.constant 0 : index
    %6 = vector.load %arg2[%c80, %c0_8] : memref<176x128xf32, #tpu.memory_space<vmem>>, vector<32x32xf32>
    %c112 = arith.constant 112 : index
    %c0_9 = arith.constant 0 : index
    %7 = vector.load %arg2[%c112, %c0_9] : memref<176x128xf32, #tpu.memory_space<vmem>>, vector<32x128xf32>
    %c144 = arith.constant 144 : index
    %c0_10 = arith.constant 0 : index
    %8 = vector.load %arg2[%c144, %c0_10] : memref<176x128xf32, #tpu.memory_space<vmem>>, vector<1x32xf32>
    %c152 = arith.constant 152 : index
    %c0_11 = arith.constant 0 : index
    %9 = vector.load %arg2[%c152, %c0_11] : memref<176x128xf32, #tpu.memory_space<vmem>>, vector<1x32xf32>
    %c160 = arith.constant 160 : index
    %c0_12 = arith.constant 0 : index
    %10 = vector.load %arg2[%c160, %c0_12] : memref<176x128xf32, #tpu.memory_space<vmem>>, vector<1x32xf32>
    %c168 = arith.constant 168 : index
    %c0_13 = arith.constant 0 : index
    %11 = vector.load %arg2[%c168, %c0_13] : memref<176x128xf32, #tpu.memory_space<vmem>>, vector<1x128xf32>
    %cst = arith.constant dense<0.000000e+00> : vector<64x5xf32>
    %12 = tpu.matmul %1, %0, %cst {dimension_numbers = #tpu.dot_dimension_numbers<[1], [0], [0], [1], [0, 0, 1, 1], [], []>} : vector<64x64xf32>, vector<64x5xf32>, vector<64x5xf32> -> vector<64x5xf32>
    %cst_14 = arith.constant dense<0.000000e+00> : vector<64x32xf32>
    %13 = tpu.matmul %0, %2, %cst_14 {dimension_numbers = #tpu.dot_dimension_numbers<[1], [0], [0], [1], [0, 0, 1, 1], [], []>} : vector<64x5xf32>, vector<5x32xf32>, vector<64x32xf32> -> vector<64x32xf32>
    %cst_15 = arith.constant dense<0.000000e+00> : vector<64x32xf32>
    %14 = tpu.matmul %12, %3, %cst_15 {dimension_numbers = #tpu.dot_dimension_numbers<[1], [0], [0], [1], [0, 0, 1, 1], [], []>} : vector<64x5xf32>, vector<5x32xf32>, vector<64x32xf32> -> vector<64x32xf32>
    %15 = arith.addf %13, %14 : vector<64x32xf32>
    %16 = vector.broadcast %8 : vector<1x32xf32> to vector<64x32xf32>
    %17 = arith.addf %15, %16 : vector<64x32xf32>
    %cst_16 = arith.constant 0.000000e+00 : f32
    %18 = vector.broadcast %cst_16 : f32 to vector<64x32xf32>
    %19 = arith.maximumf %17, %18 : vector<64x32xf32>
    %cst_17 = arith.constant dense<0.000000e+00> : vector<64x32xf32>
    %20 = tpu.matmul %1, %19, %cst_17 {dimension_numbers = #tpu.dot_dimension_numbers<[1], [0], [0], [1], [0, 0, 1, 1], [], []>} : vector<64x64xf32>, vector<64x32xf32>, vector<64x32xf32> -> vector<64x32xf32>
    %cst_18 = arith.constant dense<0.000000e+00> : vector<64x32xf32>
    %21 = tpu.matmul %19, %4, %cst_18 {dimension_numbers = #tpu.dot_dimension_numbers<[1], [0], [0], [1], [0, 0, 1, 1], [], []>} : vector<64x32xf32>, vector<32x32xf32>, vector<64x32xf32> -> vector<64x32xf32>
    %cst_19 = arith.constant dense<0.000000e+00> : vector<64x32xf32>
    %22 = tpu.matmul %20, %5, %cst_19 {dimension_numbers = #tpu.dot_dimension_numbers<[1], [0], [0], [1], [0, 0, 1, 1], [], []>} : vector<64x32xf32>, vector<32x32xf32>, vector<64x32xf32> -> vector<64x32xf32>
    %23 = arith.addf %21, %22 : vector<64x32xf32>
    %24 = vector.broadcast %9 : vector<1x32xf32> to vector<64x32xf32>
    %25 = arith.addf %23, %24 : vector<64x32xf32>
    %cst_20 = arith.constant 0.000000e+00 : f32
    %26 = vector.broadcast %cst_20 : f32 to vector<64x32xf32>
    %27 = arith.maximumf %25, %26 : vector<64x32xf32>
    %cst_21 = arith.constant dense<0.000000e+00> : vector<64x32xf32>
    %28 = tpu.matmul %27, %6, %cst_21 {dimension_numbers = #tpu.dot_dimension_numbers<[1], [0], [0], [1], [0, 0, 1, 1], [], []>} : vector<64x32xf32>, vector<32x32xf32>, vector<64x32xf32> -> vector<64x32xf32>
    %29 = vector.broadcast %10 : vector<1x32xf32> to vector<64x32xf32>
    %30 = arith.addf %28, %29 : vector<64x32xf32>
    %cst_22 = arith.constant 0.000000e+00 : f32
    %31 = vector.broadcast %cst_22 : f32 to vector<64x32xf32>
    %32 = arith.maximumf %30, %31 : vector<64x32xf32>
    %cst_23 = arith.constant dense<0.000000e+00> : vector<64x128xf32>
    %33 = tpu.matmul %32, %7, %cst_23 {dimension_numbers = #tpu.dot_dimension_numbers<[1], [0], [0], [1], [0, 0, 1, 1], [], []>} : vector<64x32xf32>, vector<32x128xf32>, vector<64x128xf32> -> vector<64x128xf32>
    %34 = vector.broadcast %11 : vector<1x128xf32> to vector<64x128xf32>
    %35 = arith.addf %33, %34 : vector<64x128xf32>
    %c0_24 = arith.constant 0 : index
    %c0_25 = arith.constant 0 : index
    %36 = vector.load %arg3[%c0_24, %c0_25] : memref<64x128xf32, #tpu.memory_space<vmem>>, vector<64x128xf32>
    tpu.vector_store %arg3[%c0_24, %c0_25], %35 {strides = array<i32>} : memref<64x128xf32, #tpu.memory_space<vmem>>, vector<64x128xf32>,
    return
  }
}

</mosaic_0001>

<llo_original>
// kernel: gcn_forward.1
$region0: #{gcn_forward.1}
  #allocation0 [shape = 'u32[]', space=smem, size = 0x4, offset = 0x4, fixed_abs, tag = 'smem constant byte address 0x4 - core index']
  #allocation1 [shape = 'u32[144,128]{1,0:T(1,128)}', space=vmem, size = 0x12000, scoped, tag = 'internal scratch']
  %s0 = inlined_call_operand.vmem [shape: f32[64,5], index: 0, kind: input, shape index: {}]
  %s1 = inlined_call_operand.vmem [shape: f32[64,64], index: 1, kind: input, shape index: {}]
  %s2 = inlined_call_operand.hbm [shape: f32[176,128], index: 2, kind: input, shape index: {}]
  %s3 = inlined_call_operand.vmem [shape: f32[64,128], index: 3, kind: output, shape index: {}]
  %s4 = sld [smem:[#allocation0]]
  $region26: #{gcn_forward.1} parent=0
    _
  %s6 = ssub.s32 1, %s4
  %s7 = scalar_select 0, %s6, %s4
  $region1: #{gcn_forward.1} parent=0
    #allocation2 [shape = 'u8[90112]{0}', space=vmem, size = 0x16000, scoped, tag = 'input window, operand 2, single buffered']
    #allocation3 [shape = 's32[1]{0}', space=sflag, size = 0x4, scoped, tag = 'scoped memory for gcn_forward.1']
    %8 = vsyncpa [#allocation3], 0
    // Predicated region
    $region2: #{gcn_forward.1} parent=1 // pred_check
      _
    $region3: #{gcn_forward.1} parent=1 // pred_check_branch
      %10 = sbr.rel (0) target = $region5
    $region4: #{gcn_forward.1} parent=1 // pred_region
      _
    $region5: #{gcn_forward.1} parent=1 // pred_fallthru
      _
    // Predicated region
    $region6: #{gcn_forward.1} parent=1 // pred_check
      _
    $region7: #{gcn_forward.1} parent=1 // pred_check_branch
      %12 = sbr.rel (0) target = $region9
    $region8: #{gcn_forward.1} parent=1 // pred_region
      _
    $region9: #{gcn_forward.1} parent=1 // pred_fallthru
      _
    // Predicated region
    $region10: #{gcn_forward.1} parent=1 // pred_check
      _
    $region11: #{gcn_forward.1} parent=1 // pred_check_branch
      %14 = sbr.rel (0) target = $region13
    $region12: #{gcn_forward.1} parent=1 // pred_region
      %s16 = ssub.s32 2816, 2816
      %17 = vsyncadd [#allocation3], %s16
      %s18 = sshll.u32 [#allocation2], 4
      %s19 = int_to_ptr.vmem [resolvable:$true] %s18
      %24 = dma.hbm_to_vmem [thread:$0]  %s2, 2816, %s19, [#allocation3], 128, 128, 8
    $region13: #{gcn_forward.1} parent=1 // pred_fallthru
      _
    // Predicated region
    $region14: #{gcn_forward.1} parent=1 // pred_check
      _
    $region15: #{gcn_forward.1} parent=1 // pred_check_branch
      %26 = sbr.rel (0) target = $region17
    $region16: #{gcn_forward.1} parent=1 // pred_region
      %27 = dma.done [#allocation3], 2816
    $region17: #{gcn_forward.1} parent=1 // pred_fallthru
      _
    %v28 = vld [vmem:[%s0] sm:$0xff]
    %v29 = vld [vmem:[%s0 + $0x8] sm:$0xff]
    %v30 = vld [vmem:[%s0 + $0x10] sm:$0xff]
    %v31 = vld [vmem:[%s0 + $0x18] sm:$0xff]
    %v32 = vld [vmem:[%s0 + $0x20] sm:$0xff]
    %v33 = vld [vmem:[%s0 + $0x28] sm:$0xff]
    %v34 = vld [vmem:[%s0 + $0x30] sm:$0xff]
    %v35 = vld [vmem:[%s0 + $0x38] sm:$0xff]
    %v36 = vld [vmem:[%s1] sm:$0xff]
    %v37 = vld [vmem:[%s1 + $0x8] sm:$0xff]
    %v38 = vld [vmem:[%s1 + $0x10] sm:$0xff]
    %v39 = vld [vmem:[%s1 + $0x18] sm:$0xff]
    %v40 = vld [vmem:[%s1 + $0x20] sm:$0xff]
    %v41 = vld [vmem:[%s1 + $0x28] sm:$0xff]
    %v42 = vld [vmem:[%s1 + $0x30] sm:$0xff]
    %v43 = vld [vmem:[%s1 + $0x38] sm:$0xff]
    %v44 = vld [vmem:[#allocation2] sm:$0x1f]
    %v45 = vld [vmem:[#allocation2 + $0x8] sm:$0x1f]
    %v46 = vld [vmem:[#allocation2 + $0x10] sm:$0xff]
    %v47 = vld [vmem:[#allocation2 + $0x18] sm:$0xff]
    %v48 = vld [vmem:[#allocation2 + $0x20] sm:$0xff]
    %v49 = vld [vmem:[#allocation2 + $0x28] sm:$0xff]
    %v50 = vld [vmem:[#allocation2 + $0x30] sm:$0xff]
    %v51 = vld [vmem:[#allocation2 + $0x38] sm:$0xff]
    %v52 = vld [vmem:[#allocation2 + $0x40] sm:$0xff]
    %v53 = vld [vmem:[#allocation2 + $0x48] sm:$0xff]
    %v54 = vld [vmem:[#allocation2 + $0x50] sm:$0xff]
    %v55 = vld [vmem:[#allocation2 + $0x58] sm:$0xff]
    %v56 = vld [vmem:[#allocation2 + $0x60] sm:$0xff]
    %v57 = vld [vmem:[#allocation2 + $0x68] sm:$0xff]
    %v58 = vld [vmem:[#allocation2 + $0x70] sm:$0xff]
    %v59 = vld [vmem:[#allocation2 + $0x78] sm:$0xff]
    %v60 = vld [vmem:[#allocation2 + $0x80] sm:$0xff]
    %v61 = vld [vmem:[#allocation2 + $0x88] sm:$0xff]
    %v62 = vld [vmem:[#allocation2 + $0x90] sm:$0x1]
    %v63 = vld [vmem:[#allocation2 + $0x98] sm:$0x1]
    %v64 = vld [vmem:[#allocation2 + $0xa0] sm:$0x1]
    %v65 = vld [vmem:[#allocation2 + $0xa8] sm:$0x1]
    %vm66 = vcmask 523264
    %v68 = vsel %vm66, %v36, 0
    %v71 = vsel %vm66, %v37, 0
    %v74 = vsel %vm66, %v38, 0
    %v77 = vsel %vm66, %v39, 0
    %v80 = vsel %vm66, %v40, 0
    %v83 = vsel %vm66, %v41, 0
    %v86 = vsel %vm66, %v42, 0
    %v89 = vsel %vm66, %v43, 0
    %91 = vmatprep.subr.mxu0 0.0
    %92 = vmatpush1.msra.mxu0 %v28
    %93 = vmatprep.subr.mxu0 0.0
    %94 = vmatpush1.msra.mxu0 %v29
    %95 = vmatprep.subr.mxu0 0.0
    %96 = vmatpush1.msra.mxu0 %v30
    %97 = vmatprep.subr.mxu0 0.0
    %98 = vmatpush1.msra.mxu0 %v31
    %99 = vmatprep.subr.mxu0 0.0
    %100 = vmatpush1.msra.mxu0 %v32
    %101 = vmatprep.subr.mxu0 0.0
    %102 = vmatpush1.msra.mxu0 %v33
    %103 = vmatprep.subr.mxu0 0.0
    %104 = vmatpush1.msra.mxu0 %v34
    %105 = vmatprep.subr.mxu0 0.0
    %106 = vmatpush1.msra.mxu0 %v35
    %107 = vmatprep.subr.mxu0 0.0
    %108 = vmatpush1.msra.mxu0 0.0
    %109 = vmatprep.subr.mxu0 0.0
    %110 = vmatpush1.msra.mxu0 0.0
    %111 = vmatprep.subr.mxu0 0.0
    %112 = vmatpush1.msra.mxu0 0.0
    %113 = vmatprep.subr.mxu0 0.0
    %114 = vmatpush1.msra.mxu0 0.0
    %115 = vmatprep.subr.mxu0 0.0
    %116 = vmatpush1.msra.mxu0 0.0
    %117 = vmatprep.subr.mxu0 0.0
    %118 = vmatpush1.msra.mxu0 0.0
    %119 = vmatprep.subr.mxu0 0.0
    %120 = vmatpush1.msra.mxu0 0.0
    %121 = vmatprep.subr.mxu0 0.0
    %122 = vmatpush1.msra.mxu0 0.0
    %123 = vmatprep.subr.mxu0 0.0
    %124 = vmatpush1.msra.mxu0 0.0
    %125 = vmatprep.subr.mxu0 0.0
    %126 = vmatpush1.msra.mxu0 0.0
    %127 = vmatprep.subr.mxu0 0.0
    %128 = vmatpush1.msra.mxu0 0.0
    %129 = vmatprep.subr.mxu0 0.0
    %130 = vmatpush1.msra.mxu0 0.0
    %131 = vmatprep.subr.mxu0 0.0
    %132 = vmatpush1.msra.mxu0 0.0
    %133 = vmatprep.subr.mxu0 0.0
    %134 = vmatpush1.msra.mxu0 0.0
    %135 = vmatprep.subr.mxu0 0.0
    %136 = vmatpush1.msra.mxu0 0.0
    %137 = vmatprep.subr.mxu0 0.0
    %138 = vmatpush1.msra.mxu0 0.0
    %139 = vmatprep.subr.mxu0 0.0
    %140 = vmatpush1.msra.mxu0 0.0
    %141 = vmatprep.subr.mxu0 0.0
    %142 = vmatpush1.msra.mxu0 0.0
    %143 = vmatprep.subr.mxu0 0.0
    %144 = vmatpush1.msra.mxu0 0.0
    %145 = vmatprep.subr.mxu0 0.0
    %146 = vmatpush1.msra.mxu0 0.0
    %147 = vmatprep.subr.mxu0 0.0
    %148 = vmatpush1.msra.mxu0 0.0
    %149 = vmatprep.subr.mxu0 0.0
    %150 = vmatpush1.msra.mxu0 0.0
    %151 = vmatprep.subr.mxu0 0.0
    %152 = vmatpush1.msra.mxu0 0.0
    %153 = vmatprep.subr.mxu0 0.0
    %154 = vmatpush1.msra.mxu0 0.0
    %155 = vmatprep.mubr.f32.mxu0 0.0
    %156 = vmatmul.mubr.f32.gmra.mrb[0].mxu0 %v68
    %v157 = vpop.f32.mrb[0].mxu0
    %v158 = vadd.f32 0.0, %v157
    %v159 = vpop.f32.mrb[0].mxu0
    %160 = vmatprep.mubr.f32.mxu0 0.0
    %161 = vmatmul.mubr.f32.gmra.mrb[0].mxu0 %v71
    %v162 = vpop.f32.mrb[0].mxu0
    %v163 = vadd.f32 0.0, %v162
    %v164 = vpop.f32.mrb[0].mxu0
    %165 = vmatprep.mubr.f32.mxu0 0.0
    %166 = vmatmul.mubr.f32.gmra.mrb[0].mxu0 %v74
    %v167 = vpop.f32.mrb[0].mxu0
    %v168 = vadd.f32 0.0, %v167
    %v169 = vpop.f32.mrb[0].mxu0
    %170 = vmatprep.mubr.f32.mxu0 0.0
    %171 = vmatmul.mubr.f32.gmra.mrb[0].mxu0 %v77
    %v172 = vpop.f32.mrb[0].mxu0
    %v173 = vadd.f32 0.0, %v172
    %v174 = vpop.f32.mrb[0].mxu0
    %175 = vmatprep.mubr.f32.mxu0 0.0
    %176 = vmatmul.mubr.f32.gmra.mrb[0].mxu0 %v80
    %v177 = vpop.f32.mrb[0].mxu0
    %v178 = vadd.f32 0.0, %v177
    %v179 = vpop.f32.mrb[0].mxu0
    %180 = vmatprep.mubr.f32.mxu0 0.0
    %181 = vmatmul.mubr.f32.gmra.mrb[0].mxu0 %v83
    %v182 = vpop.f32.mrb[0].mxu0
    %v183 = vadd.f32 0.0, %v182
    %v184 = vpop.f32.mrb[0].mxu0
    %185 = vmatprep.mubr.f32.mxu0 0.0
    %186 = vmatmul.mubr.f32.gmra.mrb[0].mxu0 %v86
    %v187 = vpop.f32.mrb[0].mxu0
    %v188 = vadd.f32 0.0, %v187
    %v189 = vpop.f32.mrb[0].mxu0
    %190 = vmatprep.mubr.f32.mxu0 0.0
    %191 = vmatmul.mubr.f32.gmra.mrb[0].mxu0 %v89
    %v192 = vpop.f32.mrb[0].mxu0
    %v193 = vadd.f32 0.0, %v192
    %v194 = vpop.f32.mrb[0].mxu0
    %195 = vdwg.mxu0
    %vm196 = vcmask 39936
    %v198 = vsel %vm196, %v158, 0
    %v201 = vsel %vm196, %v163, 0
    %v204 = vsel %vm196, %v168, 0
    %v207 = vsel %vm196, %v173, 0
    %v210 = vsel %vm196, %v178, 0
    %v213 = vsel %vm196, %v183, 0
    %v216 = vsel %vm196, %v188, 0
    %v219 = vsel %vm196, %v193, 0
    %vm221 = vcmask 1044480
    %v223 = vsel %vm221, %v45, 0
    %225 = vmatprep.subr.mxu0 0.0
    %226 = vmatpush1.msra.mxu0 %v223
    %227 = vmatprep.subr.mxu0 0.0
    %228 = vmatpush1.msra.mxu0 0.0
    %229 = vmatprep.subr.mxu0 0.0
    %230 = vmatpush1.msra.mxu0 0.0
    %231 = vmatprep.subr.mxu0 0.0
    %232 = vmatpush1.msra.mxu0 0.0
    %233 = vmatprep.subr.mxu0 0.0
    %234 = vmatpush1.msra.mxu0 0.0
    %235 = vmatprep.subr.mxu0 0.0
    %236 = vmatpush1.msra.mxu0 0.0
    %237 = vmatprep.subr.mxu0 0.0
    %238 = vmatpush1.msra.mxu0 0.0
    %239 = vmatprep.subr.mxu0 0.0
    %240 = vmatpush1.msra.mxu0 0.0
    %241 = vmatprep.subr.mxu0 0.0
    %242 = vmatpush1.msra.mxu0 0.0
    %243 = vmatprep.subr.mxu0 0.0
    %244 = vmatpush1.msra.mxu0 0.0
    %245 = vmatprep.subr.mxu0 0.0
    %246 = vmatpush1.msra.mxu0 0.0
    %247 = vmatprep.subr.mxu0 0.0
    %248 = vmatpush1.msra.mxu0 0.0
    %249 = vmatprep.subr.mxu0 0.0
    %250 = vmatpush1.msra.mxu0 0.0
    %251 = vmatprep.subr.mxu0 0.0
    %252 = vmatpush1.msra.mxu0 0.0
    %253 = vmatprep.subr.mxu0 0.0
    %254 = vmatpush1.msra.mxu0 0.0
    %255 = vmatprep.subr.mxu0 0.0
    %256 = vmatpush1.msra.mxu0 0.0
    %257 = vmatprep.subr.mxu0 0.0
    %258 = vmatpush1.msra.mxu0 0.0
    %259 = vmatprep.subr.mxu0 0.0
    %260 = vmatpush1.msra.mxu0 0.0
    %261 = vmatprep.subr.mxu0 0.0
    %262 = vmatpush1.msra.mxu0 0.0
    %263 = vmatprep.subr.mxu0 0.0
    %264 = vmatpush1.msra.mxu0 0.0
    %265 = vmatprep.subr.mxu0 0.0
    %266 = vmatpush1.msra.mxu0 0.0
    %267 = vmatprep.subr.mxu0 0.0
    %268 = vmatpush1.msra.mxu0 0.0
    %269 = vmatprep.subr.mxu0 0.0
    %270 = vmatpush1.msra.mxu0 0.0
    %271 = vmatprep.subr.mxu0 0.0
    %272 = vmatpush1.msra.mxu0 0.0
    %273 = vmatprep.subr.mxu0 0.0
    %274 = vmatpush1.msra.mxu0 0.0
    %275 = vmatprep.subr.mxu0 0.0
    %276 = vmatpush1.msra.mxu0 0.0
    %277 = vmatprep.subr.mxu0 0.0
    %278 = vmatpush1.msra.mxu0 0.0
    %279 = vmatprep.subr.mxu0 0.0
    %280 = vmatpush1.msra.mxu0 0.0
    %281 = vmatprep.subr.mxu0 0.0
    %282 = vmatpush1.msra.mxu0 0.0
    %283 = vmatprep.subr.mxu0 0.0
    %284 = vmatpush1.msra.mxu0 0.0
    %285 = vmatprep.subr.mxu0 0.0
    %286 = vmatpush1.msra.mxu0 0.0
    %287 = vmatprep.subr.mxu0 0.0
    %288 = vmatpush1.msra.mxu0 0.0
    %289 = vmatprep.mubr.f32.mxu0 0.0
    %290 = vmatmul.mubr.f32.gmra.mrb[0].mxu0 %v198
    %v291 = vpop.f32.mrb[0].mxu0
    %v292 = vadd.f32 0.0, %v291
    %v293 = vpop.f32.mrb[0].mxu0
    %294 = vmatprep.mubr.f32.mxu0 0.0
    %295 = vmatmul.mubr.f32.gmra.mrb[0].mxu0 %v201
    %v296 = vpop.f32.mrb[0].mxu0
    %v297 = vadd.f32 0.0, %v296
    %v298 = vpop.f32.mrb[0].mxu0
    %299 = vmatprep.mubr.f32.mxu0 0.0
    %300 = vmatmul.mubr.f32.gmra.mrb[0].mxu0 %v204
    %v301 = vpop.f32.mrb[0].mxu0
    %v302 = vadd.f32 0.0, %v301
    %v303 = vpop.f32.mrb[0].mxu0
    %304 = vmatprep.mubr.f32.mxu0 0.0
    %305 = vmatmul.mubr.f32.gmra.mrb[0].mxu0 %v207
    %v306 = vpop.f32.mrb[0].mxu0
    %v307 = vadd.f32 0.0, %v306
    %v308 = vpop.f32.mrb[0].mxu0
    %309 = vmatprep.mubr.f32.mxu0 0.0
    %310 = vmatmul.mubr.f32.gmra.mrb[0].mxu0 %v210
    %v311 = vpop.f32.mrb[0].mxu0
    %v312 = vadd.f32 0.0, %v311
    %v313 = vpop.f32.mrb[0].mxu0
    %314 = vmatprep.mubr.f32.mxu0 0.0
    %315 = vmatmul.mubr.f32.gmra.mrb[0].mxu0 %v213
    %v316 = vpop.f32.mrb[0].mxu0
    %v317 = vadd.f32 0.0, %v316
    %v318 = vpop.f32.mrb[0].mxu0
    %319 = vmatprep.mubr.f32.mxu0 0.0
    %320 = vmatmul.mubr.f32.gmra.mrb[0].mxu0 %v216
    %v321 = vpop.f32.mrb[0].mxu0
    %v322 = vadd.f32 0.0, %v321
    %v323 = vpop.f32.mrb[0].mxu0
    %324 = vmatprep.mubr.f32.mxu0 0.0
    %325 = vmatmul.mubr.f32.gmra.mrb[0].mxu0 %v219
    %v326 = vpop.f32.mrb[0].mxu0
    %v327 = vadd.f32 0.0, %v326
    %v328 = vpop.f32.mrb[0].mxu0
    %329 = vdwg.mxu0
    %v331 = vsel %vm196, %v28, 0
    %v334 = vsel %vm196, %v29, 0
    %v337 = vsel %vm196, %v30, 0
    %v340 = vsel %vm196, %v31, 0
    %v343 = vsel %vm196, %v32, 0
    %v346 = vsel %vm196, %v33, 0
    %v349 = vsel %vm196, %v34, 0
    %v352 = vsel %vm196, %v35, 0
    %v355 = vsel %vm221, %v44, 0
    %357 = vmatprep.subr.mxu0 0.0
    %358 = vmatpush1.msra.mxu0 %v355
    %359 = vmatprep.subr.mxu0 0.0
    %360 = vmatpush1.msra.mxu0 0.0
    %361 = vmatprep.subr.mxu0 0.0
    %362 = vmatpush1.msra.mxu0 0.0
    %363 = vmatprep.subr.mxu0 0.0
    %364 = vmatpush1.msra.mxu0 0.0
    %365 = vmatprep.subr.mxu0 0.0
    %366 = vmatpush1.msra.mxu0 0.0
    %367 = vmatprep.subr.mxu0 0.0
    %368 = vmatpush1.msra.mxu0 0.0
    %369 = vmatprep.subr.mxu0 0.0
    %370 = vmatpush1.msra.mxu0 0.0
    %371 = vmatprep.subr.mxu0 0.0
    %372 = vmatpush1.msra.mxu0 0.0
    %373 = vmatprep.subr.mxu0 0.0
    %374 = vmatpush1.msra.mxu0 0.0
    %375 = vmatprep.subr.mxu0 0.0
    %376 = vmatpush1.msra.mxu0 0.0
    %377 = vmatprep.subr.mxu0 0.0
    %378 = vmatpush1.msra.mxu0 0.0
    %379 = vmatprep.subr.mxu0 0.0
    %380 = vmatpush1.msra.mxu0 0.0
    %381 = vmatprep.subr.mxu0 0.0
    %382 = vmatpush1.msra.mxu0 0.0
    %383 = vmatprep.subr.mxu0 0.0
    %384 = vmatpush1.msra.mxu0 0.0
    %385 = vmatprep.subr.mxu0 0.0
    %386 = vmatpush1.msra.mxu0 0.0
    %387 = vmatprep.subr.mxu0 0.0
    %388 = vmatpush1.msra.mxu0 0.0
    %389 = vmatprep.subr.mxu0 0.0
    %390 = vmatpush1.msra.mxu0 0.0
    %391 = vmatprep.subr.mxu0 0.0
    %392 = vmatpush1.msra.mxu0 0.0
    %393 = vmatprep.subr.mxu0 0.0
    %394 = vmatpush1.msra.mxu0 0.0
    %395 = vmatprep.subr.mxu0 0.0
    %396 = vmatpush1.msra.mxu0 0.0
    %397 = vmatprep.subr.mxu0 0.0
    %398 = vmatpush1.msra.mxu0 0.0
    %399 = vmatprep.subr.mxu0 0.0
    %400 = vmatpush1.msra.mxu0 0.0
    %401 = vmatprep.subr.mxu0 0.0
    %402 = vmatpush1.msra.mxu0 0.0
    %403 = vmatprep.subr.mxu0 0.0
    %404 = vmatpush1.msra.mxu0 0.0
    %405 = vmatprep.subr.mxu0 0.0
    %406 = vmatpush1.msra.mxu0 0.0
    %407 = vmatprep.subr.mxu0 0.0
    %408 = vmatpush1.msra.mxu0 0.0
    %409 = vmatprep.subr.mxu0 0.0
    %410 = vmatpush1.msra.mxu0 0.0
    %411 = vmatprep.subr.mxu0 0.0
    %412 = vmatpush1.msra.mxu0 0.0
    %413 = vmatprep.subr.mxu0 0.0
    %414 = vmatpush1.msra.mxu0 0.0
    %415 = vmatprep.subr.mxu0 0.0
    %416 = vmatpush1.msra.mxu0 0.0
    %417 = vmatprep.subr.mxu0 0.0
    %418 = vmatpush1.msra.mxu0 0.0
    %419 = vmatprep.subr.mxu0 0.0
    %420 = vmatpush1.msra.mxu0 0.0
    %421 = vmatprep.mubr.f32.mxu0 0.0
    %422 = vmatmul.mubr.f32.gmra.mrb[0].mxu0 %v331
    %v423 = vpop.f32.mrb[0].mxu0
    %v424 = vadd.f32 %v292, %v423
    %v425 = vpop.f32.mrb[0].mxu0
    %426 = vmatprep.mubr.f32.mxu0 0.0
    %427 = vmatmul.mubr.f32.gmra.mrb[0].mxu0 %v334
    %v428 = vpop.f32.mrb[0].mxu0
    %v429 = vadd.f32 %v297, %v428
    %v430 = vpop.f32.mrb[0].mxu0
    %431 = vmatprep.mubr.f32.mxu0 0.0
    %432 = vmatmul.mubr.f32.gmra.mrb[0].mxu0 %v337
    %v433 = vpop.f32.mrb[0].mxu0
    %v434 = vadd.f32 %v302, %v433
    %v435 = vpop.f32.mrb[0].mxu0
    %436 = vmatprep.mubr.f32.mxu0 0.0
    %437 = vmatmul.mubr.f32.gmra.mrb[0].mxu0 %v340
    %v438 = vpop.f32.mrb[0].mxu0
    %v439 = vadd.f32 %v307, %v438
    %v440 = vpop.f32.mrb[0].mxu0
    %441 = vmatprep.mubr.f32.mxu0 0.0
    %442 = vmatmul.mubr.f32.gmra.mrb[0].mxu0 %v343
    %v443 = vpop.f32.mrb[0].mxu0
    %v444 = vadd.f32 %v312, %v443
    %v445 = vpop.f32.mrb[0].mxu0
    %446 = vmatprep.mubr.f32.mxu0 0.0
    %447 = vmatmul.mubr.f32.gmra.mrb[0].mxu0 %v346
    %v448 = vpop.f32.mrb[0].mxu0
    %v449 = vadd.f32 %v317, %v448
    %v450 = vpop.f32.mrb[0].mxu0
    %451 = vmatprep.mubr.f32.mxu0 0.0
    %452 = vmatmul.mubr.f32.gmra.mrb[0].mxu0 %v349
    %v453 = vpop.f32.mrb[0].mxu0
    %v454 = vadd.f32 %v322, %v453
    %v455 = vpop.f32.mrb[0].mxu0
    %456 = vmatprep.mubr.f32.mxu0 0.0
    %457 = vmatmul.mubr.f32.gmra.mrb[0].mxu0 %v352
    %v458 = vpop.f32.mrb[0].mxu0
    %v459 = vadd.f32 %v327, %v458
    %v460 = vpop.f32.mrb[0].mxu0
    %461 = vdwg.mxu0
    %v462 = vlaneseq
    %v463 = vshrl.u32 %v462, 7
    %v464 = vsub.s32 0, %v463
    %v465 = vrot.slane %v62, %v464
    %v466 = vadd.f32 %v424, %v465
    %v467 = vadd.f32 %v429, %v465
    %v468 = vadd.f32 %v434, %v465
    %v469 = vadd.f32 %v439, %v465
    %v470 = vadd.f32 %v444, %v465
    %v471 = vadd.f32 %v449, %v465
    %v472 = vadd.f32 %v454, %v465
    %v473 = vadd.f32 %v459, %v465
    %v474 = vmax.f32 %v466, 0.0
    %v475 = vmax.f32 %v467, 0.0
    %v476 = vmax.f32 %v468, 0.0
    %v477 = vmax.f32 %v469, 0.0
    %v478 = vmax.f32 %v470, 0.0
    %v479 = vmax.f32 %v471, 0.0
    %v480 = vmax.f32 %v472, 0.0
    %v481 = vmax.f32 %v473, 0.0
    %482 = vmatprep.subr.mxu0 0.0
    %483 = vmatpush1.msra.mxu0 %v474
    %484 = vmatprep.subr.mxu0 0.0
    %485 = vmatpush1.msra.mxu0 %v475
    %486 = vmatprep.subr.mxu0 0.0
    %487 = vmatpush1.msra.mxu0 %v476
    %488 = vmatprep.subr.mxu0 0.0
    %489 = vmatpush1.msra.mxu0 %v477
    %490 = vmatprep.subr.mxu0 0.0
    %491 = vmatpush1.msra.mxu0 %v478
    %492 = vmatprep.subr.mxu0 0.0
    %493 = vmatpush1.msra.mxu0 %v479
    %494 = vmatprep.subr.mxu0 0.0
    %495 = vmatpush1.msra.mxu0 %v480
    %496 = vmatprep.subr.mxu0 0.0
    %497 = vmatpush1.msra.mxu0 %v481
    %498 = vmatprep.subr.mxu0 0.0
    %499 = vmatpush1.msra.mxu0 0.0
    %500 = vmatprep.subr.mxu0 0.0
    %501 = vmatpush1.msra.mxu0 0.0
    %502 = vmatprep.subr.mxu0 0.0
    %503 = vmatpush1.msra.mxu0 0.0
    %504 = vmatprep.subr.mxu0 0.0
    %505 = vmatpush1.msra.mxu0 0.0
    %506 = vmatprep.subr.mxu0 0.0
    %507 = vmatpush1.msra.mxu0 0.0
    %508 = vmatprep.subr.mxu0 0.0
    %509 = vmatpush1.msra.mxu0 0.0
    %510 = vmatprep.subr.mxu0 0.0
    %511 = vmatpush1.msra.mxu0 0.0
    %512 = vmatprep.subr.mxu0 0.0
    %513 = vmatpush1.msra.mxu0 0.0
    %514 = vmatprep.subr.mxu0 0.0
    %515 = vmatpush1.msra.mxu0 0.0
    %516 = vmatprep.subr.mxu0 0.0
    %517 = vmatpush1.msra.mxu0 0.0
    %518 = vmatprep.subr.mxu0 0.0
    %519 = vmatpush1.msra.mxu0 0.0
    %520 = vmatprep.subr.mxu0 0.0
    %521 = vmatpush1.msra.mxu0 0.0
    %522 = vmatprep.subr.mxu0 0.0
    %523 = vmatpush1.msra.mxu0 0.0
    %524 = vmatprep.subr.mxu0 0.0
    %525 = vmatpush1.msra.mxu0 0.0
    %526 = vmatprep.subr.mxu0 0.0
    %527 = vmatpush1.msra.mxu0 0.0
    %528 = vmatprep.subr.mxu0 0.0
    %529 = vmatpush1.msra.mxu0 0.0
    %530 = vmatprep.subr.mxu0 0.0
    %531 = vmatpush1.msra.mxu0 0.0
    %532 = vmatprep.subr.mxu0 0.0
    %533 = vmatpush1.msra.mxu0 0.0
    %534 = vmatprep.subr.mxu0 0.0
    %535 = vmatpush1.msra.mxu0 0.0
    %536 = vmatprep.subr.mxu0 0.0
    %537 = vmatpush1.msra.mxu0 0.0
    %538 = vmatprep.subr.mxu0 0.0
    %539 = vmatpush1.msra.mxu0 0.0
    %540 = vmatprep.subr.mxu0 0.0
    %541 = vmatpush1.msra.mxu0 0.0
    %542 = vmatprep.subr.mxu0 0.0
    %543 = vmatpush1.msra.mxu0 0.0
    %544 = vmatprep.subr.mxu0 0.0
    %545 = vmatpush1.msra.mxu0 0.0
    %546 = vmatprep.mubr.f32.mxu0 0.0
    %547 = vmatmul.mubr.f32.gmra.mrb[0].mxu0 %v68
    %v548 = vpop.f32.mrb[0].mxu0
    %v549 = vadd.f32 0.0, %v548
    %v550 = vpop.f32.mrb[0].mxu0
    %551 = vmatprep.mubr.f32.mxu0 0.0
    %552 = vmatmul.mubr.f32.gmra.mrb[0].mxu0 %v71
    %v553 = vpop.f32.mrb[0].mxu0
    %v554 = vadd.f32 0.0, %v553
    %v555 = vpop.f32.mrb[0].mxu0
    %556 = vmatprep.mubr.f32.mxu0 0.0
    %557 = vmatmul.mubr.f32.gmra.mrb[0].mxu0 %v74
    %v558 = vpop.f32.mrb[0].mxu0
    %v559 = vadd.f32 0.0, %v558
    %v560 = vpop.f32.mrb[0].mxu0
    %561 = vmatprep.mubr.f32.mxu0 0.0
    %562 = vmatmul.mubr.f32.gmra.mrb[0].mxu0 %v77
    %v563 = vpop.f32.mrb[0].mxu0
    %v564 = vadd.f32 0.0, %v563
    %v565 = vpop.f32.mrb[0].mxu0
    %566 = vmatprep.mubr.f32.mxu0 0.0
    %567 = vmatmul.mubr.f32.gmra.mrb[0].mxu0 %v80
    %v568 = vpop.f32.mrb[0].mxu0
    %v569 = vadd.f32 0.0, %v568
    %v570 = vpop.f32.mrb[0].mxu0
    %571 = vmatprep.mubr.f32.mxu0 0.0
    %572 = vmatmul.mubr.f32.gmra.mrb[0].mxu0 %v83
    %v573 = vpop.f32.mrb[0].mxu0
    %v574 = vadd.f32 0.0, %v573
    %v575 = vpop.f32.mrb[0].mxu0
    %576 = vmatprep.mubr.f32.mxu0 0.0
    %577 = vmatmul.mubr.f32.gmra.mrb[0].mxu0 %v86
    %v578 = vpop.f32.mrb[0].mxu0
    %v579 = vadd.f32 0.0, %v578
    %v580 = vpop.f32.mrb[0].mxu0
    %581 = vmatprep.mubr.f32.mxu0 0.0
    %582 = vmatmul.mubr.f32.gmra.mrb[0].mxu0 %v89
    %v583 = vpop.f32.mrb[0].mxu0
    %v584 = vadd.f32 0.0, %v583
    %v585 = vpop.f32.mrb[0].mxu0
    %586 = vdwg.mxu0
    %vm587 = vcmask 261120
    %v589 = vsel %vm587, %v549, 0
    %v592 = vsel %vm587, %v554, 0
    %v595 = vsel %vm587, %v559, 0
    %v598 = vsel %vm587, %v564, 0
    %v601 = vsel %vm587, %v569, 0
    %v604 = vsel %vm587, %v574, 0
    %v607 = vsel %vm587, %v579, 0
    %v610 = vsel %vm587, %v584, 0
    %612 = vmatprep.subr.mxu0 0.0
    %613 = vmatpush1.msra.mxu0 %v50
    %614 = vmatprep.subr.mxu0 0.0
    %615 = vmatpush1.msra.mxu0 %v51
    %616 = vmatprep.subr.mxu0 0.0
    %617 = vmatpush1.msra.mxu0 %v52
    %618 = vmatprep.subr.mxu0 0.0
    %619 = vmatpush1.msra.mxu0 %v53
    %620 = vmatprep.subr.mxu0 0.0
    %621 = vmatpush1.msra.mxu0 0.0
    %622 = vmatprep.subr.mxu0 0.0
    %623 = vmatpush1.msra.mxu0 0.0
    %624 = vmatprep.subr.mxu0 0.0
    %625 = vmatpush1.msra.mxu0 0.0
    %626 = vmatprep.subr.mxu0 0.0
    %627 = vmatpush1.msra.mxu0 0.0
    %628 = vmatprep.subr.mxu0 0.0
    %629 = vmatpush1.msra.mxu0 0.0
    %630 = vmatprep.subr.mxu0 0.0
    %631 = vmatpush1.msra.mxu0 0.0
    %632 = vmatprep.subr.mxu0 0.0
    %633 = vmatpush1.msra.mxu0 0.0
    %634 = vmatprep.subr.mxu0 0.0
    %635 = vmatpush1.msra.mxu0 0.0
    %636 = vmatprep.subr.mxu0 0.0
    %637 = vmatpush1.msra.mxu0 0.0
    %638 = vmatprep.subr.mxu0 0.0
    %639 = vmatpush1.msra.mxu0 0.0
    %640 = vmatprep.subr.mxu0 0.0
    %641 = vmatpush1.msra.mxu0 0.0
    %642 = vmatprep.subr.mxu0 0.0
    %643 = vmatpush1.msra.mxu0 0.0
    %644 = vmatprep.subr.mxu0 0.0
    %645 = vmatpush1.msra.mxu0 0.0
    %646 = vmatprep.subr.mxu0 0.0
    %647 = vmatpush1.msra.mxu0 0.0
    %648 = vmatprep.subr.mxu0 0.0
    %649 = vmatpush1.msra.mxu0 0.0
    %650 = vmatprep.subr.mxu0 0.0
    %651 = vmatpush1.msra.mxu0 0.0
    %652 = vmatprep.subr.mxu0 0.0
    %653 = vmatpush1.msra.mxu0 0.0
    %654 = vmatprep.subr.mxu0 0.0
    %655 = vmatpush1.msra.mxu0 0.0
    %656 = vmatprep.subr.mxu0 0.0
    %657 = vmatpush1.msra.mxu0 0.0
    %658 = vmatprep.subr.mxu0 0.0
    %659 = vmatpush1.msra.mxu0 0.0
    %660 = vmatprep.subr.mxu0 0.0
    %661 = vmatpush1.msra.mxu0 0.0
    %662 = vmatprep.subr.mxu0 0.0
    %663 = vmatpush1.msra.mxu0 0.0
    %664 = vmatprep.subr.mxu0 0.0
    %665 = vmatpush1.msra.mxu0 0.0
    %666 = vmatprep.subr.mxu0 0.0
    %667 = vmatpush1.msra.mxu0 0.0
    %668 = vmatprep.subr.mxu0 0.0
    %669 = vmatpush1.msra.mxu0 0.0
    %670 = vmatprep.subr.mxu0 0.0
    %671 = vmatpush1.msra.mxu0 0.0
    %672 = vmatprep.subr.mxu0 0.0
    %673 = vmatpush1.msra.mxu0 0.0
    %674 = vmatprep.subr.mxu0 0.0
    %675 = vmatpush1.msra.mxu0 0.0
    %676 = vmatprep.mubr.f32.mxu0 0.0
    %677 = vmatmul.mubr.f32.gmra.mrb[0].mxu0 %v589
    %v678 = vpop.f32.mrb[0].mxu0
    %v679 = vadd.f32 0.0, %v678
    %v680 = vpop.f32.mrb[0].mxu0
    %681 = vmatprep.mubr.f32.mxu0 0.0
    %682 = vmatmul.mubr.f32.gmra.mrb[0].mxu0 %v592
    %v683 = vpop.f32.mrb[0].mxu0
    %v684 = vadd.f32 0.0, %v683
    %v685 = vpop.f32.mrb[0].mxu0
    %686 = vmatprep.mubr.f32.mxu0 0.0
    %687 = vmatmul.mubr.f32.gmra.mrb[0].mxu0 %v595
    %v688 = vpop.f32.mrb[0].mxu0
    %v689 = vadd.f32 0.0, %v688
    %v690 = vpop.f32.mrb[0].mxu0
    %691 = vmatprep.mubr.f32.mxu0 0.0
    %692 = vmatmul.mubr.f32.gmra.mrb[0].mxu0 %v598
    %v693 = vpop.f32.mrb[0].mxu0
    %v694 = vadd.f32 0.0, %v693
    %v695 = vpop.f32.mrb[0].mxu0
    %696 = vmatprep.mubr.f32.mxu0 0.0
    %697 = vmatmul.mubr.f32.gmra.mrb[0].mxu0 %v601
    %v698 = vpop.f32.mrb[0].mxu0
    %v699 = vadd.f32 0.0, %v698
    %v700 = vpop.f32.mrb[0].mxu0
    %701 = vmatprep.mubr.f32.mxu0 0.0
    %702 = vmatmul.mubr.f32.gmra.mrb[0].mxu0 %v604
    %v703 = vpop.f32.mrb[0].mxu0
    %v704 = vadd.f32 0.0, %v703
    %v705 = vpop.f32.mrb[0].mxu0
    %706 = vmatprep.mubr.f32.mxu0 0.0
    %707 = vmatmul.mubr.f32.gmra.mrb[0].mxu0 %v607
    %v708 = vpop.f32.mrb[0].mxu0
    %v709 = vadd.f32 0.0, %v708
    %v710 = vpop.f32.mrb[0].mxu0
    %711 = vmatprep.mubr.f32.mxu0 0.0
    %712 = vmatmul.mubr.f32.gmra.mrb[0].mxu0 %v610
    %v713 = vpop.f32.mrb[0].mxu0
    %v714 = vadd.f32 0.0, %v713
    %v715 = vpop.f32.mrb[0].mxu0
    %716 = vdwg.mxu0
    %v718 = vsel %vm587, %v474, 0
    %v721 = vsel %vm587, %v475, 0
    %v724 = vsel %vm587, %v476, 0
    %v727 = vsel %vm587, %v477, 0
    %v730 = vsel %vm587, %v478, 0
    %v733 = vsel %vm587, %v479, 0
    %v736 = vsel %vm587, %v480, 0
    %v739 = vsel %vm587, %v481, 0
    %741 = vmatprep.subr.mxu0 0.0
    %742 = vmatpush1.msra.mxu0 %v46
    %743 = vmatprep.subr.mxu0 0.0
    %744 = vmatpush1.msra.mxu0 %v47
    %745 = vmatprep.subr.mxu0 0.0
    %746 = vmatpush1.msra.mxu0 %v48
    %747 = vmatprep.subr.mxu0 0.0
    %748 = vmatpush1.msra.mxu0 %v49
    %749 = vmatprep.subr.mxu0 0.0
    %750 = vmatpush1.msra.mxu0 0.0
    %751 = vmatprep.subr.mxu0 0.0
    %752 = vmatpush1.msra.mxu0 0.0
    %753 = vmatprep.subr.mxu0 0.0
    %754 = vmatpush1.msra.mxu0 0.0
    %755 = vmatprep.subr.mxu0 0.0
    %756 = vmatpush1.msra.mxu0 0.0
    %757 = vmatprep.subr.mxu0 0.0
    %758 = vmatpush1.msra.mxu0 0.0
    %759 = vmatprep.subr.mxu0 0.0
    %760 = vmatpush1.msra.mxu0 0.0
    %761 = vmatprep.subr.mxu0 0.0
    %762 = vmatpush1.msra.mxu0 0.0
    %763 = vmatprep.subr.mxu0 0.0
    %764 = vmatpush1.msra.mxu0 0.0
    %765 = vmatprep.subr.mxu0 0.0
    %766 = vmatpush1.msra.mxu0 0.0
    %767 = vmatprep.subr.mxu0 0.0
    %768 = vmatpush1.msra.mxu0 0.0
    %769 = vmatprep.subr.mxu0 0.0
    %770 = vmatpush1.msra.mxu0 0.0
    %771 = vmatprep.subr.mxu0 0.0
    %772 = vmatpush1.msra.mxu0 0.0
    %773 = vmatprep.subr.mxu0 0.0
    %774 = vmatpush1.msra.mxu0 0.0
    %775 = vmatprep.subr.mxu0 0.0
    %776 = vmatpush1.msra.mxu0 0.0
    %777 = vmatprep.subr.mxu0 0.0
    %778 = vmatpush1.msra.mxu0 0.0
    %779 = vmatprep.subr.mxu0 0.0
    %780 = vmatpush1.msra.mxu0 0.0
    %781 = vmatprep.subr.mxu0 0.0
    %782 = vmatpush1.msra.mxu0 0.0
    %783 = vmatprep.subr.mxu0 0.0
    %784 = vmatpush1.msra.mxu0 0.0
    %785 = vmatprep.subr.mxu0 0.0
    %786 = vmatpush1.msra.mxu0 0.0
    %787 = vmatprep.subr.mxu0 0.0
    %788 = vmatpush1.msra.mxu0 0.0
    %789 = vmatprep.subr.mxu0 0.0
    %790 = vmatpush1.msra.mxu0 0.0
    %791 = vmatprep.subr.mxu0 0.0
    %792 = vmatpush1.msra.mxu0 0.0
    %793 = vmatprep.subr.mxu0 0.0
    %794 = vmatpush1.msra.mxu0 0.0
    %795 = vmatprep.subr.mxu0 0.0
    %796 = vmatpush1.msra.mxu0 0.0
    %797 = vmatprep.subr.mxu0 0.0
    %798 = vmatpush1.msra.mxu0 0.0
    %799 = vmatprep.subr.mxu0 0.0
    %800 = vmatpush1.msra.mxu0 0.0
    %801 = vmatprep.subr.mxu0 0.0
    %802 = vmatpush1.msra.mxu0 0.0
    %803 = vmatprep.subr.mxu0 0.0
    %804 = vmatpush1.msra.mxu0 0.0
    %805 = vmatprep.mubr.f32.mxu0 0.0
    %806 = vmatmul.mubr.f32.gmra.mrb[0].mxu0 %v718
    %v807 = vpop.f32.mrb[0].mxu0
    %v808 = vadd.f32 %v679, %v807
    %v809 = vpop.f32.mrb[0].mxu0
    %810 = vmatprep.mubr.f32.mxu0 0.0
    %811 = vmatmul.mubr.f32.gmra.mrb[0].mxu0 %v721
    %v812 = vpop.f32.mrb[0].mxu0
    %v813 = vadd.f32 %v684, %v812
    %v814 = vpop.f32.mrb[0].mxu0
    %815 = vmatprep.mubr.f32.mxu0 0.0
    %816 = vmatmul.mubr.f32.gmra.mrb[0].mxu0 %v724
    %v817 = vpop.f32.mrb[0].mxu0
    %v818 = vadd.f32 %v689, %v817
    %v819 = vpop.f32.mrb[0].mxu0
    %820 = vmatprep.mubr.f32.mxu0 0.0
    %821 = vmatmul.mubr.f32.gmra.mrb[0].mxu0 %v727
    %v822 = vpop.f32.mrb[0].mxu0
    %v823 = vadd.f32 %v694, %v822
    %v824 = vpop.f32.mrb[0].mxu0
    %825 = vmatprep.mubr.f32.mxu0 0.0
    %826 = vmatmul.mubr.f32.gmra.mrb[0].mxu0 %v730
    %v827 = vpop.f32.mrb[0].mxu0
    %v828 = vadd.f32 %v699, %v827
    %v829 = vpop.f32.mrb[0].mxu0
    %830 = vmatprep.mubr.f32.mxu0 0.0
    %831 = vmatmul.mubr.f32.gmra.mrb[0].mxu0 %v733
    %v832 = vpop.f32.mrb[0].mxu0
    %v833 = vadd.f32 %v704, %v832
    %v834 = vpop.f32.mrb[0].mxu0
    %835 = vmatprep.mubr.f32.mxu0 0.0
    %836 = vmatmul.mubr.f32.gmra.mrb[0].mxu0 %v736
    %v837 = vpop.f32.mrb[0].mxu0
    %v838 = vadd.f32 %v709, %v837
    %v839 = vpop.f32.mrb[0].mxu0
    %840 = vmatprep.mubr.f32.mxu0 0.0
    %841 = vmatmul.mubr.f32.gmra.mrb[0].mxu0 %v739
    %v842 = vpop.f32.mrb[0].mxu0
    %v843 = vadd.f32 %v714, %v842
    %v844 = vpop.f32.mrb[0].mxu0
    %845 = vdwg.mxu0
    %v846 = vlaneseq
    %v847 = vshrl.u32 %v846, 7
    %v848 = vsub.s32 0, %v847
    %v849 = vrot.slane %v63, %v848
    %v850 = vadd.f32 %v808, %v849
    %v851 = vadd.f32 %v813, %v849
    %v852 = vadd.f32 %v818, %v849
    %v853 = vadd.f32 %v823, %v849
    %v854 = vadd.f32 %v828, %v849
    %v855 = vadd.f32 %v833, %v849
    %v856 = vadd.f32 %v838, %v849
    %v857 = vadd.f32 %v843, %v849
    %v858 = vmax.f32 %v850, 0.0
    %v859 = vmax.f32 %v851, 0.0
    %v860 = vmax.f32 %v852, 0.0
    %v861 = vmax.f32 %v853, 0.0
    %v862 = vmax.f32 %v854, 0.0
    %v863 = vmax.f32 %v855, 0.0
    %v864 = vmax.f32 %v856, 0.0
    %v865 = vmax.f32 %v857, 0.0
    %v866 = vlaneseq
    %v867 = vshrl.u32 %v866, 7
    %v868 = vsub.s32 0, %v867
    %v869 = vrot.slane %v64, %v868
    %v871 = vsel %vm587, %v858, 0
    %v874 = vsel %vm587, %v859, 0
    %v877 = vsel %vm587, %v860, 0
    %v880 = vsel %vm587, %v861, 0
    %v883 = vsel %vm587, %v862, 0
    %v886 = vsel %vm587, %v863, 0
    %v889 = vsel %vm587, %v864, 0
    %v892 = vsel %vm587, %v865, 0
    %894 = vmatprep.subr.mxu0 0.0
    %895 = vmatpush1.msra.mxu0 %v54
    %896 = vmatprep.subr.mxu0 0.0
    %897 = vmatpush1.msra.mxu0 %v55
    %898 = vmatprep.subr.mxu0 0.0
    %899 = vmatpush1.msra.mxu0 %v56
    %900 = vmatprep.subr.mxu0 0.0
    %901 = vmatpush1.msra.mxu0 %v57
    %902 = vmatprep.subr.mxu0 0.0
    %903 = vmatpush1.msra.mxu0 0.0
    %904 = vmatprep.subr.mxu0 0.0
    %905 = vmatpush1.msra.mxu0 0.0
    %906 = vmatprep.subr.mxu0 0.0
    %907 = vmatpush1.msra.mxu0 0.0
    %908 = vmatprep.subr.mxu0 0.0
    %909 = vmatpush1.msra.mxu0 0.0
    %910 = vmatprep.subr.mxu0 0.0
    %911 = vmatpush1.msra.mxu0 0.0
    %912 = vmatprep.subr.mxu0 0.0
    %913 = vmatpush1.msra.mxu0 0.0
    %914 = vmatprep.subr.mxu0 0.0
    %915 = vmatpush1.msra.mxu0 0.0
    %916 = vmatprep.subr.mxu0 0.0
    %917 = vmatpush1.msra.mxu0 0.0
    %918 = vmatprep.subr.mxu0 0.0
    %919 = vmatpush1.msra.mxu0 0.0
    %920 = vmatprep.subr.mxu0 0.0
    %921 = vmatpush1.msra.mxu0 0.0
    %922 = vmatprep.subr.mxu0 0.0
    %923 = vmatpush1.msra.mxu0 0.0
    %924 = vmatprep.subr.mxu0 0.0
    %925 = vmatpush1.msra.mxu0 0.0
    %926 = vmatprep.subr.mxu0 0.0
    %927 = vmatpush1.msra.mxu0 0.0
    %928 = vmatprep.subr.mxu0 0.0
    %929 = vmatpush1.msra.mxu0 0.0
    %930 = vmatprep.subr.mxu0 0.0
    %931 = vmatpush1.msra.mxu0 0.0
    %932 = vmatprep.subr.mxu0 0.0
    %933 = vmatpush1.msra.mxu0 0.0
    %934 = vmatprep.subr.mxu0 0.0
    %935 = vmatpush1.msra.mxu0 0.0
    %936 = vmatprep.subr.mxu0 0.0
    %937 = vmatpush1.msra.mxu0 0.0
    %938 = vmatprep.subr.mxu0 0.0
    %939 = vmatpush1.msra.mxu0 0.0
    %940 = vmatprep.subr.mxu0 0.0
    %941 = vmatpush1.msra.mxu0 0.0
    %942 = vmatprep.subr.mxu0 0.0
    %943 = vmatpush1.msra.mxu0 0.0
    %944 = vmatprep.subr.mxu0 0.0
    %945 = vmatpush1.msra.mxu0 0.0
    %946 = vmatprep.subr.mxu0 0.0
    %947 = vmatpush1.msra.mxu0 0.0
    %948 = vmatprep.subr.mxu0 0.0
    %949 = vmatpush1.msra.mxu0 0.0
    %950 = vmatprep.subr.mxu0 0.0
    %951 = vmatpush1.msra.mxu0 0.0
    %952 = vmatprep.subr.mxu0 0.0
    %953 = vmatpush1.msra.mxu0 0.0
    %954 = vmatprep.subr.mxu0 0.0
    %955 = vmatpush1.msra.mxu0 0.0
    %956 = vmatprep.subr.mxu0 0.0
    %957 = vmatpush1.msra.mxu0 0.0
    %958 = vmatprep.mubr.f32.mxu0 0.0
    %959 = vmatmul.mubr.f32.gmra.mrb[0].mxu0 %v871
    %v960 = vpop.f32.mrb[0].mxu0
    %v961 = vadd.f32 %v869, %v960
    %v962 = vpop.f32.mrb[0].mxu0
    %963 = vmatprep.mubr.f32.mxu0 0.0
    %964 = vmatmul.mubr.f32.gmra.mrb[0].mxu0 %v874
    %v965 = vpop.f32.mrb[0].mxu0
    %v966 = vadd.f32 %v869, %v965
    %v967 = vpop.f32.mrb[0].mxu0
    %968 = vmatprep.mubr.f32.mxu0 0.0
    %969 = vmatmul.mubr.f32.gmra.mrb[0].mxu0 %v877
    %v970 = vpop.f32.mrb[0].mxu0
    %v971 = vadd.f32 %v869, %v970
    %v972 = vpop.f32.mrb[0].mxu0
    %973 = vmatprep.mubr.f32.mxu0 0.0
    %974 = vmatmul.mubr.f32.gmra.mrb[0].mxu0 %v880
    %v975 = vpop.f32.mrb[0].mxu0
    %v976 = vadd.f32 %v869, %v975
    %v977 = vpop.f32.mrb[0].mxu0
    %978 = vmatprep.mubr.f32.mxu0 0.0
    %979 = vmatmul.mubr.f32.gmra.mrb[0].mxu0 %v883
    %v980 = vpop.f32.mrb[0].mxu0
    %v981 = vadd.f32 %v869, %v980
    %v982 = vpop.f32.mrb[0].mxu0
    %983 = vmatprep.mubr.f32.mxu0 0.0
    %984 = vmatmul.mubr.f32.gmra.mrb[0].mxu0 %v886
    %v985 = vpop.f32.mrb[0].mxu0
    %v986 = vadd.f32 %v869, %v985
    %v987 = vpop.f32.mrb[0].mxu0
    %988 = vmatprep.mubr.f32.mxu0 0.0
    %989 = vmatmul.mubr.f32.gmra.mrb[0].mxu0 %v889
    %v990 = vpop.f32.mrb[0].mxu0
    %v991 = vadd.f32 %v869, %v990
    %v992 = vpop.f32.mrb[0].mxu0
    %993 = vmatprep.mubr.f32.mxu0 0.0
    %994 = vmatmul.mubr.f32.gmra.mrb[0].mxu0 %v892
    %v995 = vpop.f32.mrb[0].mxu0
    %v996 = vadd.f32 %v869, %v995
    %v997 = vpop.f32.mrb[0].mxu0
    %998 = vdwg.mxu0
    %v999 = vmax.f32 %v961, 0.0
    %v1000 = vmax.f32 %v966, 0.0
    %v1001 = vmax.f32 %v971, 0.0
    %v1002 = vmax.f32 %v976, 0.0
    %v1003 = vmax.f32 %v981, 0.0
    %v1004 = vmax.f32 %v986, 0.0
    %v1005 = vmax.f32 %v991, 0.0
    %v1006 = vmax.f32 %v996, 0.0
    %v1007 = vlaneseq
    %v1008 = vshrl.u32 %v1007, 7
    %v1009 = vsub.s32 0, %v1008
    %v1010 = vrot.slane %v65, %v1009
    %v1012 = vsel %vm587, %v999, 0
    %v1015 = vsel %vm587, %v1000, 0
    %v1018 = vsel %vm587, %v1001, 0
    %v1021 = vsel %vm587, %v1002, 0
    %v1024 = vsel %vm587, %v1003, 0
    %v1027 = vsel %vm587, %v1004, 0
    %v1030 = vsel %vm587, %v1005, 0
    %v1033 = vsel %vm587, %v1006, 0
    %1035 = vmatprep.subr.mxu0 0.0
    %1036 = vmatpush1.msra.mxu0 %v58
    %1037 = vmatprep.subr.mxu0 0.0
    %1038 = vmatpush1.msra.mxu0 %v59
    %1039 = vmatprep.subr.mxu0 0.0
    %1040 = vmatpush1.msra.mxu0 %v60
    %1041 = vmatprep.subr.mxu0 0.0
    %1042 = vmatpush1.msra.mxu0 %v61
    %1043 = vmatprep.subr.mxu0 0.0
    %1044 = vmatpush1.msra.mxu0 0.0
    %1045 = vmatprep.subr.mxu0 0.0
    %1046 = vmatpush1.msra.mxu0 0.0
    %1047 = vmatprep.subr.mxu0 0.0
    %1048 = vmatpush1.msra.mxu0 0.0
    %1049 = vmatprep.subr.mxu0 0.0
    %1050 = vmatpush1.msra.mxu0 0.0
    %1051 = vmatprep.subr.mxu0 0.0
    %1052 = vmatpush1.msra.mxu0 0.0
    %1053 = vmatprep.subr.mxu0 0.0
    %1054 = vmatpush1.msra.mxu0 0.0
    %1055 = vmatprep.subr.mxu0 0.0
    %1056 = vmatpush1.msra.mxu0 0.0
    %1057 = vmatprep.subr.mxu0 0.0
    %1058 = vmatpush1.msra.mxu0 0.0
    %1059 = vmatprep.subr.mxu0 0.0
    %1060 = vmatpush1.msra.mxu0 0.0
    %1061 = vmatprep.subr.mxu0 0.0
    %1062 = vmatpush1.msra.mxu0 0.0
    %1063 = vmatprep.subr.mxu0 0.0
    %1064 = vmatpush1.msra.mxu0 0.0
    %1065 = vmatprep.subr.mxu0 0.0
    %1066 = vmatpush1.msra.mxu0 0.0
    %1067 = vmatprep.subr.mxu0 0.0
    %1068 = vmatpush1.msra.mxu0 0.0
    %1069 = vmatprep.subr.mxu0 0.0
    %1070 = vmatpush1.msra.mxu0 0.0
    %1071 = vmatprep.subr.mxu0 0.0
    %1072 = vmatpush1.msra.mxu0 0.0
    %1073 = vmatprep.subr.mxu0 0.0
    %1074 = vmatpush1.msra.mxu0 0.0
    %1075 = vmatprep.subr.mxu0 0.0
    %1076 = vmatpush1.msra.mxu0 0.0
    %1077 = vmatprep.subr.mxu0 0.0
    %1078 = vmatpush1.msra.mxu0 0.0
    %1079 = vmatprep.subr.mxu0 0.0
    %1080 = vmatpush1.msra.mxu0 0.0
    %1081 = vmatprep.subr.mxu0 0.0
    %1082 = vmatpush1.msra.mxu0 0.0
    %1083 = vmatprep.subr.mxu0 0.0
    %1084 = vmatpush1.msra.mxu0 0.0
    %1085 = vmatprep.subr.mxu0 0.0
    %1086 = vmatpush1.msra.mxu0 0.0
    %1087 = vmatprep.subr.mxu0 0.0
    %1088 = vmatpush1.msra.mxu0 0.0
    %1089 = vmatprep.subr.mxu0 0.0
    %1090 = vmatpush1.msra.mxu0 0.0
    %1091 = vmatprep.subr.mxu0 0.0
    %1092 = vmatpush1.msra.mxu0 0.0
    %1093 = vmatprep.subr.mxu0 0.0
    %1094 = vmatpush1.msra.mxu0 0.0
    %1095 = vmatprep.subr.mxu0 0.0
    %1096 = vmatpush1.msra.mxu0 0.0
    %1097 = vmatprep.subr.mxu0 0.0
    %1098 = vmatpush1.msra.mxu0 0.0
    %1099 = vmatprep.mubr.f32.mxu0 0.0
    %1100 = vmatmul.mubr.f32.gmra.mrb[0].mxu0 %v1012
    %v1101 = vpop.f32.mrb[0].mxu0
    %v1102 = vadd.f32 %v1010, %v1101
    %v1103 = vpop.f32.mrb[0].mxu0
    %1104 = vmatprep.mubr.f32.mxu0 0.0
    %1105 = vmatmul.mubr.f32.gmra.mrb[0].mxu0 %v1015
    %v1106 = vpop.f32.mrb[0].mxu0
    %v1107 = vadd.f32 %v1010, %v1106
    %v1108 = vpop.f32.mrb[0].mxu0
    %1109 = vmatprep.mubr.f32.mxu0 0.0
    %1110 = vmatmul.mubr.f32.gmra.mrb[0].mxu0 %v1018
    %v1111 = vpop.f32.mrb[0].mxu0
    %v1112 = vadd.f32 %v1010, %v1111
    %v1113 = vpop.f32.mrb[0].mxu0
    %1114 = vmatprep.mubr.f32.mxu0 0.0
    %1115 = vmatmul.mubr.f32.gmra.mrb[0].mxu0 %v1021
    %v1116 = vpop.f32.mrb[0].mxu0
    %v1117 = vadd.f32 %v1010, %v1116
    %v1118 = vpop.f32.mrb[0].mxu0
    %1119 = vmatprep.mubr.f32.mxu0 0.0
    %1120 = vmatmul.mubr.f32.gmra.mrb[0].mxu0 %v1024
    %v1121 = vpop.f32.mrb[0].mxu0
    %v1122 = vadd.f32 %v1010, %v1121
    %v1123 = vpop.f32.mrb[0].mxu0
    %1124 = vmatprep.mubr.f32.mxu0 0.0
    %1125 = vmatmul.mubr.f32.gmra.mrb[0].mxu0 %v1027
    %v1126 = vpop.f32.mrb[0].mxu0
    %v1127 = vadd.f32 %v1010, %v1126
    %v1128 = vpop.f32.mrb[0].mxu0
    %1129 = vmatprep.mubr.f32.mxu0 0.0
    %1130 = vmatmul.mubr.f32.gmra.mrb[0].mxu0 %v1030
    %v1131 = vpop.f32.mrb[0].mxu0
    %v1132 = vadd.f32 %v1010, %v1131
    %v1133 = vpop.f32.mrb[0].mxu0
    %1134 = vmatprep.mubr.f32.mxu0 0.0
    %1135 = vmatmul.mubr.f32.gmra.mrb[0].mxu0 %v1033
    %v1136 = vpop.f32.mrb[0].mxu0
    %v1137 = vadd.f32 %v1010, %v1136
    %v1138 = vpop.f32.mrb[0].mxu0
    %1139 = vdwg.mxu0
    %1140 = vst [vmem:[%s3] sm:$0xff] %v1102
    %1141 = vst [vmem:[%s3 + $0x8] sm:$0xff] %v1107
    %1142 = vst [vmem:[%s3 + $0x10] sm:$0xff] %v1112
    %1143 = vst [vmem:[%s3 + $0x18] sm:$0xff] %v1117
    %1144 = vst [vmem:[%s3 + $0x20] sm:$0xff] %v1122
    %1145 = vst [vmem:[%s3 + $0x28] sm:$0xff] %v1127
    %1146 = vst [vmem:[%s3 + $0x30] sm:$0xff] %v1132
    %1147 = vst [vmem:[%s3 + $0x38] sm:$0xff] %v1137
    // Predicated region
    $region18: #{gcn_forward.1} parent=1 // pred_check
      _
    $region19: #{gcn_forward.1} parent=1 // pred_check_branch
      %1149 = sbr.rel (0) target = $region21
    $region20: #{gcn_forward.1} parent=1 // pred_region
      _
    $region21: #{gcn_forward.1} parent=1 // pred_fallthru
      _
    // Predicated region
    $region22: #{gcn_forward.1} parent=1 // pred_check
      _
    $region23: #{gcn_forward.1} parent=1 // pred_check_branch
      %1151 = sbr.rel (0) target = $region25
    $region24: #{gcn_forward.1} parent=1 // pred_region
      _
    $region25: #{gcn_forward.1} parent=1 // pred_fallthru
      _
    %1152 = vsyncpa [#allocation3], 1

</llo_original>
